<compile_context>
chip_gen: v6e
topology: v6e:2x2x1
jax: 0.10.0
libtpu: 0.0.40
codegen_flags: <defaults>
</compile_context>

<pallas_src>
import functools

import jax
import jax.numpy as jnp
from jax.experimental import pallas as pl
from jax.experimental.pallas import tpu as pltpu


def _round_up(x: int, m: int) -> int:
    return (x + m - 1) // m * m


def _mlp_kernel(*refs, apply_dropout: bool):
    if apply_dropout:
        x_ref, w1_ref, b1_ref, w2_ref, b2_ref, mask_ref, out_ref = refs
    else:
        x_ref, w1_ref, b1_ref, w2_ref, b2_ref, out_ref = refs
        mask_ref = None

    # ---- lin1: bf16 MXU inputs, f32 accumulation; bias + relu in f32 ----
    h = jnp.dot(x_ref[...], w1_ref[...],
                preferred_element_type=jnp.float32) + b1_ref[...]
    h = jnp.maximum(h, 0.0)

    # ---- dropout(p=0.5): mask is 0.0 or 2.0 (keep * 1/(1-p)), one vmul ----
    if apply_dropout:
        h = h * mask_ref[...]

    # ---- lin2: bf16 inputs, f32 accumulation ----
    out = jnp.dot(h.astype(jnp.bfloat16), w2_ref[...],
                  preferred_element_type=jnp.float32) + b2_ref[...]
    out_ref[...] = out.astype(out_ref.dtype)


def mlp_forward(x, w1, b1, w2, b2, *, training=False, dropout_key=None, tm=256):
    """x: (N, F_in) float32; w1: (F_in, H); w2: (H, C). Returns (N, C) f32."""
    n, f_in = x.shape
    hidden = w1.shape[1]
    n_cls = w2.shape[1]

    # Lane-pad every contraction/output dim to a multiple of 128.
    f_pad = _round_up(f_in, 128)
    h_pad = _round_up(hidden, 128)
    c_pad = _round_up(n_cls, 128)

    # Row tiling: cdiv grid; even step count (>1) for v7x's 2 TensorCores.
    steps = -(-n // tm)
    if steps > 1 and steps % 2 == 1:
        steps += 1
    n_pad = steps * tm

    # Zero-padded, bf16 matmul operands (exact: extra rows/cols are zero).
    x_p = jnp.zeros((n_pad, f_pad), jnp.bfloat16).at[:n, :f_in].set(
        x.astype(jnp.bfloat16))
    w1_p = jnp.zeros((f_pad, h_pad), jnp.bfloat16).at[:f_in, :hidden].set(
        w1.astype(jnp.bfloat16))
    b1_p = jnp.zeros((1, h_pad), jnp.float32).at[:, :hidden].set(
        jnp.reshape(b1, (1, -1)).astype(jnp.float32))
    w2_p = jnp.zeros((h_pad, c_pad), jnp.bfloat16).at[:hidden, :n_cls].set(
        w2.astype(jnp.bfloat16))
    b2_p = jnp.zeros((1, c_pad), jnp.float32).at[:, :n_cls].set(
        jnp.reshape(b2, (1, -1)).astype(jnp.float32))

    in_specs = [
        pl.BlockSpec((tm, f_pad), lambda i: (i, 0)),      # x row tile
        pl.BlockSpec((f_pad, h_pad), lambda i: (0, 0)),   # W1 (VMEM-resident)
        pl.BlockSpec((1, h_pad), lambda i: (0, 0)),       # b1
        pl.BlockSpec((h_pad, c_pad), lambda i: (0, 0)),   # W2 (VMEM-resident)
        pl.BlockSpec((1, c_pad), lambda i: (0, 0)),       # b2
    ]
    inputs = [x_p, w1_p, b1_p, w2_p, b2_p]

    if training:
        # TODO(synk): dropout mask is Bernoulli(0.5) from jax.random (not
        # torch's RNG stream); generated host-side so the kernel also runs
        # under interpret mode where pltpu.prng_* is unavailable.
        if dropout_key is None:
            dropout_key = jax.random.PRNGKey(0)
        keep = jax.random.bernoulli(dropout_key, 0.5, (n_pad, h_pad))
        mask = keep.astype(jnp.float32) * 2.0             # 0.0 or 1/(1-p)
        in_specs.append(pl.BlockSpec((tm, h_pad), lambda i: (i, 0)))
        inputs.append(mask)

    kernel = functools.partial(_mlp_kernel, apply_dropout=training)

    grid_spec = pltpu.PrefetchScalarGridSpec(
        num_scalar_prefetch=0,
        grid=(steps,),
        in_specs=in_specs,
        out_specs=pl.BlockSpec((tm, c_pad), lambda i: (i, 0)),
    )

    out_padded = pl.pallas_call(
        kernel,
        out_shape=jax.ShapeDtypeStruct((n_pad, c_pad), jnp.float32),
        grid_spec=grid_spec,
        compiler_params=pltpu.CompilerParams(
            dimension_semantics=("parallel",),
            vmem_limit_bytes=64 * 1024 * 1024),
    )(*inputs)

    return out_padded[:n, :n_cls]


def _reference(x, w1, b1, w2, b2):
    # eval-mode reference (dropout is identity), pure f32
    h = jnp.maximum(x @ w1 + jnp.reshape(b1, (1, -1)), 0.0)
    return h @ w2 + jnp.reshape(b2, (1, -1))


if __name__ == "__main__":
    # Small shapes standing in for Cora (num_features=1433 -> 64,
    # hidden_channels -> 32, num_classes=7 kept exactly). N is deliberately
    # not a multiple of the row tile to exercise the cdiv/padding path.
    N_NODES, F_IN, HIDDEN, N_CLASSES = 200, 64, 32, 7

    key = jax.random.PRNGKey(0)
    kx, kw1, kb1, kw2, kb2, kdrop = jax.random.split(key, 6)

    x = jax.random.normal(kx, (N_NODES, F_IN), dtype=jnp.float32)

    # "torch.nn.Linear"-style params, stored (in, out) (transposed once here).
    lim1 = 1.0 / jnp.sqrt(F_IN)
    w1 = jax.random.uniform(kw1, (F_IN, HIDDEN), jnp.float32, -lim1, lim1)
    b1 = jax.random.uniform(kb1, (1, HIDDEN), jnp.float32, -lim1, lim1)
    lim2 = 1.0 / jnp.sqrt(HIDDEN)
    w2 = jax.random.uniform(kw2, (HIDDEN, N_CLASSES), jnp.float32, -lim2, lim2)
    b2 = jax.random.uniform(kb2, (1, N_CLASSES), jnp.float32, -lim2, lim2)

    # Eval-mode run (dropout = identity): check against pure-JAX f32 reference
    # (bf16 matmul operands -> looser tolerance).
    out_eval = jax.block_until_ready(
        mlp_forward(x, w1, b1, w2, b2, training=False))
    ref = _reference(x, w1, b1, w2, b2)
    assert out_eval.shape == (N_NODES, N_CLASSES)
    assert jnp.allclose(out_eval, ref, atol=5e-2, rtol=5e-2)

    # Training-mode run (dropout applied inside the kernel via a mask input).
    out_train = jax.block_until_ready(
        mlp_forward(x, w1, b1, w2, b2, training=True, dropout_key=kdrop))
    assert out_train.shape == (N_NODES, N_CLASSES)
    assert bool(jnp.all(jnp.isfinite(out_train)))

    print("KERNEL_OK")
</pallas_src>

<mosaic_0001>
module attributes {stable_mosaic.version = 11 : i64} {
  func.func @_mlp_kernel(%arg0: i32, %arg1: memref<256x128xbf16, #tpu.memory_space<vmem>>, %arg2: memref<128x128xbf16, #tpu.memory_space<vmem>>, %arg3: memref<1x128xf32, #tpu.memory_space<vmem>>, %arg4: memref<128x128xbf16, #tpu.memory_space<vmem>>, %arg5: memref<1x128xf32, #tpu.memory_space<vmem>>, %arg6: memref<256x128xf32, #tpu.memory_space<vmem>>) attributes {dimension_semantics = [#tpu.dimension_semantics<parallel>], iteration_bounds = array<i64: 1>, scalar_prefetch = 0 : i64, scratch_operands = 0 : i64, tpu.core_type = #tpu.core_type<tc>, window_params = [{transform_indices = @transform_0, window_bounds = array<i64: 256, 128>}, {pipeline_mode = #tpu.pipeline_mode<synchronous>, transform_indices = @transform_1, window_bounds = array<i64: 128, 128>}, {pipeline_mode = #tpu.pipeline_mode<synchronous>, transform_indices = @transform_2, window_bounds = array<i64: 1, 128>}, {pipeline_mode = #tpu.pipeline_mode<synchronous>, transform_indices = @transform_3, window_bounds = array<i64: 128, 128>}, {pipeline_mode = #tpu.pipeline_mode<synchronous>, transform_indices = @transform_4, window_bounds = array<i64: 1, 128>}, {transform_indices = @transform_5, window_bounds = array<i64: 256, 128>}]} {
    %c0 = arith.constant 0 : index
    %c0_0 = arith.constant 0 : index
    %0 = vector.load %arg1[%c0, %c0_0] : memref<256x128xbf16, #tpu.memory_space<vmem>>, vector<256x128xbf16>
    %c0_1 = arith.constant 0 : index
    %c0_2 = arith.constant 0 : index
    %1 = vector.load %arg2[%c0_1, %c0_2] : memref<128x128xbf16, #tpu.memory_space<vmem>>, vector<128x128xbf16>
    %cst = arith.constant dense<0.000000e+00> : vector<256x128xf32>
    %2 = tpu.matmul %0, %1, %cst {dimension_numbers = #tpu.dot_dimension_numbers<[1], [0], [0], [1], [0, 0, 1, 1], [], []>} : vector<256x128xbf16>, vector<128x128xbf16>, vector<256x128xf32> -> vector<256x128xf32>
    %c0_3 = arith.constant 0 : index
    %c0_4 = arith.constant 0 : index
    %3 = vector.load %arg3[%c0_3, %c0_4] : memref<1x128xf32, #tpu.memory_space<vmem>>, vector<1x128xf32>
    %4 = vector.broadcast %3 : vector<1x128xf32> to vector<256x128xf32>
    %5 = arith.addf %2, %4 : vector<256x128xf32>
    %cst_5 = arith.constant 0.000000e+00 : f32
    %6 = vector.broadcast %cst_5 : f32 to vector<256x128xf32>
    %7 = arith.maximumf %5, %6 : vector<256x128xf32>
    %8 = arith.truncf %7 : vector<256x128xf32> to vector<256x128xbf16>
    %c0_6 = arith.constant 0 : index
    %c0_7 = arith.constant 0 : index
    %9 = vector.load %arg4[%c0_6, %c0_7] : memref<128x128xbf16, #tpu.memory_space<vmem>>, vector<128x128xbf16>
    %cst_8 = arith.constant dense<0.000000e+00> : vector<256x128xf32>
    %10 = tpu.matmul %8, %9, %cst_8 {dimension_numbers = #tpu.dot_dimension_numbers<[1], [0], [0], [1], [0, 0, 1, 1], [], []>} : vector<256x128xbf16>, vector<128x128xbf16>, vector<256x128xf32> -> vector<256x128xf32>
    %c0_9 = arith.constant 0 : index
    %c0_10 = arith.constant 0 : index
    %11 = vector.load %arg5[%c0_9, %c0_10] : memref<1x128xf32, #tpu.memory_space<vmem>>, vector<1x128xf32>
    %12 = vector.broadcast %11 : vector<1x128xf32> to vector<256x128xf32>
    %13 = arith.addf %10, %12 : vector<256x128xf32>
    %c0_11 = arith.constant 0 : index
    %c0_12 = arith.constant 0 : index
    %14 = vector.load %arg6[%c0_11, %c0_12] : memref<256x128xf32, #tpu.memory_space<vmem>>, vector<256x128xf32>
    tpu.vector_store %arg6[%c0_11, %c0_12], %13 {strides = array<i32>} : memref<256x128xf32, #tpu.memory_space<vmem>>, vector<256x128xf32>,
    return
  }
  func.func @transform_0(%arg0: i32) -> (i32, i32) {
    %c0_i32 = arith.constant 0 : i32
    %c0_i32_0 = arith.constant 0 : i32
    return %arg0, %c0_i32 : i32, i32
  }
  func.func @transform_1(%arg0: i32) -> (i32, i32) {
    %c0_i32 = arith.constant 0 : i32
    %c0_i32_0 = arith.constant 0 : i32
    %c0_i32_1 = arith.constant 0 : i32
    return %c0_i32, %c0_i32_0 : i32, i32
  }
  func.func @transform_2(%arg0: i32) -> (i32, i32) {
    %c0_i32 = arith.constant 0 : i32
    %c0_i32_0 = arith.constant 0 : i32
    %c0_i32_1 = arith.constant 0 : i32
    return %c0_i32, %c0_i32_0 : i32, i32
  }
  func.func @transform_3(%arg0: i32) -> (i32, i32) {
    %c0_i32 = arith.constant 0 : i32
    %c0_i32_0 = arith.constant 0 : i32
    %c0_i32_1 = arith.constant 0 : i32
    return %c0_i32, %c0_i32_0 : i32, i32
  }
  func.func @transform_4(%arg0: i32) -> (i32, i32) {
    %c0_i32 = arith.constant 0 : i32
    %c0_i32_0 = arith.constant 0 : i32
    %c0_i32_1 = arith.constant 0 : i32
    return %c0_i32, %c0_i32_0 : i32, i32
  }
  func.func @transform_5(%arg0: i32) -> (i32, i32) {
    %c0_i32 = arith.constant 0 : i32
    %c0_i32_0 = arith.constant 0 : i32
    return %arg0, %c0_i32 : i32, i32
  }
}

</mosaic_0001>

<llo_original>
// kernel: tpu_custom_call.1
$region0: #{tpu_custom_call.1}
  #allocation0 [shape = 'u32[]', space=smem, size = 0x4, offset = 0x4, fixed_abs, tag = 'smem constant byte address 0x4 - core index']
  #allocation1 [shape = 'u32[144,128]{1,0:T(1,128)}', space=vmem, size = 0x12000, scoped, tag = 'internal scratch']
  %s0 = inlined_call_operand.hbm [shape: bf16[256,128], index: 0, kind: input, shape index: {}]
  %s1 = inlined_call_operand.hbm [shape: bf16[128,128], index: 1, kind: input, shape index: {}]
  %s2 = inlined_call_operand.vmem [shape: f32[1,128], index: 2, kind: input, shape index: {}]
  %s3 = inlined_call_operand.hbm [shape: bf16[128,128], index: 3, kind: input, shape index: {}]
  %s4 = inlined_call_operand.vmem [shape: f32[1,128], index: 4, kind: input, shape index: {}]
  %s5 = inlined_call_operand.hbm [shape: f32[256,128], index: 5, kind: output, shape index: {}]
  %s6 = sld [smem:[#allocation0]]
  $region42: #{tpu_custom_call.1} parent=0
    _
  %s8 = ssub.s32 1, %s6
  %s9 = scalar_select 0, %s8, %s6
  $region1: #{tpu_custom_call.1} parent=0
    #allocation2 [shape = 'u8[65536]{0}', space=vmem, size = 0x10000, scoped, tag = 'input window, operand 0, single buffered']
    #allocation3 [shape = 's32[1]{0}', space=sflag, size = 0x4, scoped, tag = 'scoped memory for tpu_custom_call.1']
    #allocation4 [shape = 's32[1]{0}', space=sflag, size = 0x4, scoped, tag = 'scoped memory for tpu_custom_call.1']
    #allocation5 [shape = 'u8[32768]{0}', space=vmem, size = 0x8000, scoped, tag = 'input window, operand 1, single buffered']
    #allocation6 [shape = 's32[1]{0}', space=sflag, size = 0x4, scoped, tag = 'scoped memory for tpu_custom_call.1']
    #allocation7 [shape = 'u8[32768]{0}', space=vmem, size = 0x8000, scoped, tag = 'input window, operand 3, single buffered']
    #allocation8 [shape = 'u8[131072]{0}', space=vmem, size = 0x20000, scoped, tag = 'output window, operand 0, single buffered']
    %10 = vsyncpa [#allocation3], 0
    %11 = vsyncpa [#allocation6], 0
    %12 = vsyncpa [#allocation4], 0
    // Predicated region
    $region2: #{tpu_custom_call.1} parent=1 // pred_check
      _
    $region3: #{tpu_custom_call.1} parent=1 // pred_check_branch
      %14 = sbr.rel (0) target = $region5
    $region4: #{tpu_custom_call.1} parent=1 // pred_region
      %s16 = ssub.s32 2048, 2048
      %17 = vsyncadd [#allocation3], %s16
      %s18 = sshll.u32 [#allocation2], 4
      %s19 = int_to_ptr.vmem [resolvable:$true] %s18
      %24 = dma.hbm_to_vmem [thread:$0]  %s0, 2048, %s19, [#allocation3], 64, 64, 4
    $region5: #{tpu_custom_call.1} parent=1 // pred_fallthru
      _
    // Predicated region
    $region6: #{tpu_custom_call.1} parent=1 // pred_check
      _
    $region7: #{tpu_custom_call.1} parent=1 // pred_check_branch
      %26 = sbr.rel (0) target = $region9
    $region8: #{tpu_custom_call.1} parent=1 // pred_region
      %s28 = ssub.s32 1024, 1024
      %29 = vsyncadd [#allocation6], %s28
      %s30 = sshll.u32 [#allocation5], 4
      %s31 = int_to_ptr.vmem [resolvable:$true] %s30
      %36 = dma.hbm_to_vmem [thread:$0]  %s1, 1024, %s31, [#allocation6], 64, 64, 4
    $region9: #{tpu_custom_call.1} parent=1 // pred_fallthru
      _
    // Predicated region
    $region10: #{tpu_custom_call.1} parent=1 // pred_check
      _
    $region11: #{tpu_custom_call.1} parent=1 // pred_check_branch
      %38 = sbr.rel (0) target = $region13
    $region12: #{tpu_custom_call.1} parent=1 // pred_region
      _
    $region13: #{tpu_custom_call.1} parent=1 // pred_fallthru
      _
    // Predicated region
    $region14: #{tpu_custom_call.1} parent=1 // pred_check
      _
    $region15: #{tpu_custom_call.1} parent=1 // pred_check_branch
      %40 = sbr.rel (0) target = $region17
    $region16: #{tpu_custom_call.1} parent=1 // pred_region
      %s42 = ssub.s32 1024, 1024
      %43 = vsyncadd [#allocation6], %s42
      %s44 = sshll.u32 [#allocation7], 4
      %s45 = int_to_ptr.vmem [resolvable:$true] %s44
      %50 = dma.hbm_to_vmem [thread:$0]  %s3, 1024, %s45, [#allocation6], 64, 64, 4
    $region17: #{tpu_custom_call.1} parent=1 // pred_fallthru
      _
    // Predicated region
    $region18: #{tpu_custom_call.1} parent=1 // pred_check
      _
    $region19: #{tpu_custom_call.1} parent=1 // pred_check_branch
      %52 = sbr.rel (0) target = $region21
    $region20: #{tpu_custom_call.1} parent=1 // pred_region
      _
    $region21: #{tpu_custom_call.1} parent=1 // pred_fallthru
      _
    // Predicated region
    $region22: #{tpu_custom_call.1} parent=1 // pred_check
      _
    $region23: #{tpu_custom_call.1} parent=1 // pred_check_branch
      %54 = sbr.rel (0) target = $region25
    $region24: #{tpu_custom_call.1} parent=1 // pred_region
      %55 = dma.done [#allocation3], 2048
    $region25: #{tpu_custom_call.1} parent=1 // pred_fallthru
      _
    // Predicated region
    $region26: #{tpu_custom_call.1} parent=1 // pred_check
      _
    $region27: #{tpu_custom_call.1} parent=1 // pred_check_branch
      %57 = sbr.rel (0) target = $region29
    $region28: #{tpu_custom_call.1} parent=1 // pred_region
      %58 = dma.done [#allocation6], 1024
    $region29: #{tpu_custom_call.1} parent=1 // pred_fallthru
      _
    // Predicated region
    $region30: #{tpu_custom_call.1} parent=1 // pred_check
      _
    $region31: #{tpu_custom_call.1} parent=1 // pred_check_branch
      %60 = sbr.rel (0) target = $region33
    $region32: #{tpu_custom_call.1} parent=1 // pred_region
      %61 = dma.done [#allocation6], 1024
    $region33: #{tpu_custom_call.1} parent=1 // pred_fallthru
      _
    %v63 = vld [vmem:[#allocation2] sm:$0xf]
    %v64 = vld [vmem:[#allocation2 + $0x4] sm:$0xf]
    %v65 = vld [vmem:[#allocation2 + $0x8] sm:$0xf]
    %v66 = vld [vmem:[#allocation2 + $0xc] sm:$0xf]
    %v67 = vld [vmem:[#allocation2 + $0x10] sm:$0xf]
    %v68 = vld [vmem:[#allocation2 + $0x14] sm:$0xf]
    %v69 = vld [vmem:[#allocation2 + $0x18] sm:$0xf]
    %v70 = vld [vmem:[#allocation2 + $0x1c] sm:$0xf]
    %v71 = vld [vmem:[#allocation2 + $0x20] sm:$0xf]
    %v72 = vld [vmem:[#allocation2 + $0x24] sm:$0xf]
    %v73 = vld [vmem:[#allocation2 + $0x28] sm:$0xf]
    %v74 = vld [vmem:[#allocation2 + $0x2c] sm:$0xf]
    %v75 = vld [vmem:[#allocation2 + $0x30] sm:$0xf]
    %v76 = vld [vmem:[#allocation2 + $0x34] sm:$0xf]
    %v77 = vld [vmem:[#allocation2 + $0x38] sm:$0xf]
    %v78 = vld [vmem:[#allocation2 + $0x3c] sm:$0xf]
    %v79 = vld [vmem:[#allocation2 + $0x40] sm:$0xf]
    %v80 = vld [vmem:[#allocation2 + $0x44] sm:$0xf]
    %v81 = vld [vmem:[#allocation2 + $0x48] sm:$0xf]
    %v82 = vld [vmem:[#allocation2 + $0x4c] sm:$0xf]
    %v83 = vld [vmem:[#allocation2 + $0x50] sm:$0xf]
    %v84 = vld [vmem:[#allocation2 + $0x54] sm:$0xf]
    %v85 = vld [vmem:[#allocation2 + $0x58] sm:$0xf]
    %v86 = vld [vmem:[#allocation2 + $0x5c] sm:$0xf]
    %v87 = vld [vmem:[#allocation2 + $0x60] sm:$0xf]
    %v88 = vld [vmem:[#allocation2 + $0x64] sm:$0xf]
    %v89 = vld [vmem:[#allocation2 + $0x68] sm:$0xf]
    %v90 = vld [vmem:[#allocation2 + $0x6c] sm:$0xf]
    %v91 = vld [vmem:[#allocation2 + $0x70] sm:$0xf]
    %v92 = vld [vmem:[#allocation2 + $0x74] sm:$0xf]
    %v93 = vld [vmem:[#allocation2 + $0x78] sm:$0xf]
    %v94 = vld [vmem:[#allocation2 + $0x7c] sm:$0xf]
    %v95 = vld [vmem:[#allocation5] sm:$0xf]
    %v96 = vld [vmem:[#allocation5 + $0x4] sm:$0xf]
    %v97 = vld [vmem:[#allocation5 + $0x8] sm:$0xf]
    %v98 = vld [vmem:[#allocation5 + $0xc] sm:$0xf]
    %v99 = vld [vmem:[#allocation5 + $0x10] sm:$0xf]
    %v100 = vld [vmem:[#allocation5 + $0x14] sm:$0xf]
    %v101 = vld [vmem:[#allocation5 + $0x18] sm:$0xf]
    %v102 = vld [vmem:[#allocation5 + $0x1c] sm:$0xf]
    %v103 = vld [vmem:[#allocation5 + $0x20] sm:$0xf]
    %v104 = vld [vmem:[#allocation5 + $0x24] sm:$0xf]
    %v105 = vld [vmem:[#allocation5 + $0x28] sm:$0xf]
    %v106 = vld [vmem:[#allocation5 + $0x2c] sm:$0xf]
    %v107 = vld [vmem:[#allocation5 + $0x30] sm:$0xf]
    %v108 = vld [vmem:[#allocation5 + $0x34] sm:$0xf]
    %v109 = vld [vmem:[#allocation5 + $0x38] sm:$0xf]
    %v110 = vld [vmem:[#allocation5 + $0x3c] sm:$0xf]
    %v111 = vld [vmem:[%s2] sm:$0x1]
    %v113 = vlaneseq
    %v114 = vshrl.u32 %v113, 7
    %v115 = vsub.s32 0, %v114
    %v116 = vrot.slane %v111, %v115
    %v150 = vunpack.c.l.b16 %v63
    %v151 = vunpack.c.l.b16 %v64
    %v152 = vunpack.c.l.b16 %v65
    %v153 = vunpack.c.l.b16 %v66
    %v154 = vunpack.c.l.b16 %v67
    %v155 = vunpack.c.l.b16 %v68
    %v156 = vunpack.c.l.b16 %v69
    %v157 = vunpack.c.l.b16 %v70
    %v158 = vunpack.c.l.b16 %v71
    %v159 = vunpack.c.l.b16 %v72
    %v160 = vunpack.c.l.b16 %v73
    %v161 = vunpack.c.l.b16 %v74
    %v162 = vunpack.c.l.b16 %v75
    %v163 = vunpack.c.l.b16 %v76
    %v164 = vunpack.c.l.b16 %v77
    %v165 = vunpack.c.l.b16 %v78
    %v166 = vunpack.c.l.b16 %v79
    %v167 = vunpack.c.l.b16 %v80
    %v168 = vunpack.c.l.b16 %v81
    %v169 = vunpack.c.l.b16 %v82
    %v170 = vunpack.c.l.b16 %v83
    %v171 = vunpack.c.l.b16 %v84
    %v172 = vunpack.c.l.b16 %v85
    %v173 = vunpack.c.l.b16 %v86
    %v174 = vunpack.c.l.b16 %v87
    %v175 = vunpack.c.l.b16 %v88
    %v176 = vunpack.c.l.b16 %v89
    %v177 = vunpack.c.l.b16 %v90
    %v178 = vunpack.c.l.b16 %v91
    %v179 = vunpack.c.l.b16 %v92
    %v180 = vunpack.c.l.b16 %v93
    %v181 = vunpack.c.l.b16 %v94
    %v182 = vpack.c.b16 %v151, %v150
    %v183 = vpack.c.b16 %v153, %v152
    %v184 = vpack.c.b16 %v155, %v154
    %v185 = vpack.c.b16 %v157, %v156
    %v186 = vpack.c.b16 %v159, %v158
    %v187 = vpack.c.b16 %v161, %v160
    %v188 = vpack.c.b16 %v163, %v162
    %v189 = vpack.c.b16 %v165, %v164
    %v190 = vpack.c.b16 %v167, %v166
    %v191 = vpack.c.b16 %v169, %v168
    %v192 = vpack.c.b16 %v171, %v170
    %v193 = vpack.c.b16 %v173, %v172
    %v194 = vpack.c.b16 %v175, %v174
    %v195 = vpack.c.b16 %v177, %v176
    %v196 = vpack.c.b16 %v179, %v178
    %v197 = vpack.c.b16 %v181, %v180
    %v230 = vunpack.c.l.b16 %v95
    %v231 = vunpack.c.l.b16 %v96
    %v232 = vunpack.c.l.b16 %v97
    %v233 = vunpack.c.l.b16 %v98
    %v234 = vunpack.c.l.b16 %v99
    %v235 = vunpack.c.l.b16 %v100
    %v236 = vunpack.c.l.b16 %v101
    %v237 = vunpack.c.l.b16 %v102
    %v238 = vunpack.c.l.b16 %v103
    %v239 = vunpack.c.l.b16 %v104
    %v240 = vunpack.c.l.b16 %v105
    %v241 = vunpack.c.l.b16 %v106
    %v242 = vunpack.c.l.b16 %v107
    %v243 = vunpack.c.l.b16 %v108
    %v244 = vunpack.c.l.b16 %v109
    %v245 = vunpack.c.l.b16 %v110
    %v246 = vpack.c.b16 %v231, %v230
    %v247 = vpack.c.b16 %v233, %v232
    %v248 = vpack.c.b16 %v235, %v234
    %v249 = vpack.c.b16 %v237, %v236
    %v250 = vpack.c.b16 %v239, %v238
    %v251 = vpack.c.b16 %v241, %v240
    %v252 = vpack.c.b16 %v243, %v242
    %v253 = vpack.c.b16 %v245, %v244
    %262 = vmatprep.subr.bf16.mxu0 0
    %263 = vmatpush1.bf16.msra.mxu0 %v253
    %264 = vmatprep.subr.bf16.mxu0 0
    %265 = vmatpush1.bf16.msra.mxu0 %v252
    %266 = vmatprep.subr.bf16.mxu0 0
    %267 = vmatpush1.bf16.msra.mxu0 %v251
    %268 = vmatprep.subr.bf16.mxu0 0
    %269 = vmatpush1.bf16.msra.mxu0 %v250
    %270 = vmatprep.subr.bf16.mxu0 0
    %271 = vmatpush1.bf16.msra.mxu0 %v249
    %272 = vmatprep.subr.bf16.mxu0 0
    %273 = vmatpush1.bf16.msra.mxu0 %v248
    %274 = vmatprep.subr.bf16.mxu0 0
    %275 = vmatpush1.bf16.msra.mxu0 %v247
    %276 = vmatprep.subr.bf16.mxu0 0
    %277 = vmatpush1.bf16.msra.mxu0 %v246
    %278 = vmatprep.subr.bf16.mxu0 0
    %279 = vmatpush2.bf16.msra.mxu0 0
    %280 = vmatprep.subr.bf16.mxu0 0
    %281 = vmatpush2.bf16.msra.mxu0 0
    %282 = vmatprep.subr.bf16.mxu0 0
    %283 = vmatpush2.bf16.msra.mxu0 0
    %284 = vmatprep.subr.bf16.mxu0 0
    %285 = vmatpush2.bf16.msra.mxu0 0
    %286 = vmatprep.subr.bf16.mxu0 0
    %287 = vmatpush2.bf16.msra.mxu0 0
    %288 = vmatprep.subr.bf16.mxu0 0
    %289 = vmatpush2.bf16.msra.mxu0 0
    %290 = vmatprep.subr.bf16.mxu0 0
    %291 = vmatpush2.bf16.msra.mxu0 0
    %292 = vmatprep.subr.bf16.mxu0 0
    %293 = vmatpush2.bf16.msra.mxu0 0
    %294 = vmatprep.mubr.bf16.mxu0 0
    %295 = vmatmul.mubr.bf16.gmra.mxu0 %v182
    %v296 = vpop.f32.mrf.mxu0
    %v297 = vadd.f32 %v116, %v296
    %v298 = vpop.f32.mrf.mxu0
    %v299 = vpop.f32.mrf.mxu0
    %v300 = vadd.f32 %v116, %v299
    %v301 = vpop.f32.mrf.mxu0
    %302 = vmatprep.mubr.bf16.mxu0 0
    %303 = vmatmul.mubr.bf16.gmra.mxu0 %v183
    %v304 = vpop.f32.mrf.mxu0
    %v305 = vadd.f32 %v116, %v304
    %v306 = vpop.f32.mrf.mxu0
    %v307 = vpop.f32.mrf.mxu0
    %v308 = vadd.f32 %v116, %v307
    %v309 = vpop.f32.mrf.mxu0
    %310 = vmatprep.mubr.bf16.mxu0 0
    %311 = vmatmul.mubr.bf16.gmra.mxu0 %v184
    %v312 = vpop.f32.mrf.mxu0
    %v313 = vadd.f32 %v116, %v312
    %v314 = vpop.f32.mrf.mxu0
    %v315 = vpop.f32.mrf.mxu0
    %v316 = vadd.f32 %v116, %v315
    %v317 = vpop.f32.mrf.mxu0
    %318 = vmatprep.mubr.bf16.mxu0 0
    %319 = vmatmul.mubr.bf16.gmra.mxu0 %v185
    %v320 = vpop.f32.mrf.mxu0
    %v321 = vadd.f32 %v116, %v320
    %v322 = vpop.f32.mrf.mxu0
    %v323 = vpop.f32.mrf.mxu0
    %v324 = vadd.f32 %v116, %v323
    %v325 = vpop.f32.mrf.mxu0
    %326 = vmatprep.mubr.bf16.mxu0 0
    %327 = vmatmul.mubr.bf16.gmra.mxu0 %v186
    %v328 = vpop.f32.mrf.mxu0
    %v329 = vadd.f32 %v116, %v328
    %v330 = vpop.f32.mrf.mxu0
    %v331 = vpop.f32.mrf.mxu0
    %v332 = vadd.f32 %v116, %v331
    %v333 = vpop.f32.mrf.mxu0
    %334 = vmatprep.mubr.bf16.mxu0 0
    %335 = vmatmul.mubr.bf16.gmra.mxu0 %v187
    %v336 = vpop.f32.mrf.mxu0
    %v337 = vadd.f32 %v116, %v336
    %v338 = vpop.f32.mrf.mxu0
    %v339 = vpop.f32.mrf.mxu0
    %v340 = vadd.f32 %v116, %v339
    %v341 = vpop.f32.mrf.mxu0
    %342 = vmatprep.mubr.bf16.mxu0 0
    %343 = vmatmul.mubr.bf16.gmra.mxu0 %v188
    %v344 = vpop.f32.mrf.mxu0
    %v345 = vadd.f32 %v116, %v344
    %v346 = vpop.f32.mrf.mxu0
    %v347 = vpop.f32.mrf.mxu0
    %v348 = vadd.f32 %v116, %v347
    %v349 = vpop.f32.mrf.mxu0
    %350 = vmatprep.mubr.bf16.mxu0 0
    %351 = vmatmul.mubr.bf16.gmra.mxu0 %v189
    %v352 = vpop.f32.mrf.mxu0
    %v353 = vadd.f32 %v116, %v352
    %v354 = vpop.f32.mrf.mxu0
    %v355 = vpop.f32.mrf.mxu0
    %v356 = vadd.f32 %v116, %v355
    %v357 = vpop.f32.mrf.mxu0
    %358 = vmatprep.mubr.bf16.mxu0 0
    %359 = vmatmul.mubr.bf16.gmra.mxu0 %v190
    %v360 = vpop.f32.mrf.mxu0
    %v361 = vadd.f32 %v116, %v360
    %v362 = vpop.f32.mrf.mxu0
    %v363 = vpop.f32.mrf.mxu0
    %v364 = vadd.f32 %v116, %v363
    %v365 = vpop.f32.mrf.mxu0
    %366 = vmatprep.mubr.bf16.mxu0 0
    %367 = vmatmul.mubr.bf16.gmra.mxu0 %v191
    %v368 = vpop.f32.mrf.mxu0
    %v369 = vadd.f32 %v116, %v368
    %v370 = vpop.f32.mrf.mxu0
    %v371 = vpop.f32.mrf.mxu0
    %v372 = vadd.f32 %v116, %v371
    %v373 = vpop.f32.mrf.mxu0
    %374 = vmatprep.mubr.bf16.mxu0 0
    %375 = vmatmul.mubr.bf16.gmra.mxu0 %v192
    %v376 = vpop.f32.mrf.mxu0
    %v377 = vadd.f32 %v116, %v376
    %v378 = vpop.f32.mrf.mxu0
    %v379 = vpop.f32.mrf.mxu0
    %v380 = vadd.f32 %v116, %v379
    %v381 = vpop.f32.mrf.mxu0
    %382 = vmatprep.mubr.bf16.mxu0 0
    %383 = vmatmul.mubr.bf16.gmra.mxu0 %v193
    %v384 = vpop.f32.mrf.mxu0
    %v385 = vadd.f32 %v116, %v384
    %v386 = vpop.f32.mrf.mxu0
    %v387 = vpop.f32.mrf.mxu0
    %v388 = vadd.f32 %v116, %v387
    %v389 = vpop.f32.mrf.mxu0
    %390 = vmatprep.mubr.bf16.mxu0 0
    %391 = vmatmul.mubr.bf16.gmra.mxu0 %v194
    %v392 = vpop.f32.mrf.mxu0
    %v393 = vadd.f32 %v116, %v392
    %v394 = vpop.f32.mrf.mxu0
    %v395 = vpop.f32.mrf.mxu0
    %v396 = vadd.f32 %v116, %v395
    %v397 = vpop.f32.mrf.mxu0
    %398 = vmatprep.mubr.bf16.mxu0 0
    %399 = vmatmul.mubr.bf16.gmra.mxu0 %v195
    %v400 = vpop.f32.mrf.mxu0
    %v401 = vadd.f32 %v116, %v400
    %v402 = vpop.f32.mrf.mxu0
    %v403 = vpop.f32.mrf.mxu0
    %v404 = vadd.f32 %v116, %v403
    %v405 = vpop.f32.mrf.mxu0
    %406 = vmatprep.mubr.bf16.mxu0 0
    %407 = vmatmul.mubr.bf16.gmra.mxu0 %v196
    %v408 = vpop.f32.mrf.mxu0
    %v409 = vadd.f32 %v116, %v408
    %v410 = vpop.f32.mrf.mxu0
    %v411 = vpop.f32.mrf.mxu0
    %v412 = vadd.f32 %v116, %v411
    %v413 = vpop.f32.mrf.mxu0
    %414 = vmatprep.mubr.bf16.mxu0 0
    %415 = vmatmul.mubr.bf16.gmra.mxu0 %v197
    %v416 = vpop.f32.mrf.mxu0
    %v417 = vadd.f32 %v116, %v416
    %v418 = vpop.f32.mrf.mxu0
    %v419 = vpop.f32.mrf.mxu0
    %v420 = vadd.f32 %v116, %v419
    %v421 = vpop.f32.mrf.mxu0
    %422 = vdwg.mxu0
    %v423 = vmax.f32 %v297, 0.0
    %v424 = vmax.f32 %v300, 0.0
    %v425 = vmax.f32 %v305, 0.0
    %v426 = vmax.f32 %v308, 0.0
    %v427 = vmax.f32 %v313, 0.0
    %v428 = vmax.f32 %v316, 0.0
    %v429 = vmax.f32 %v321, 0.0
    %v430 = vmax.f32 %v324, 0.0
    %v431 = vmax.f32 %v329, 0.0
    %v432 = vmax.f32 %v332, 0.0
    %v433 = vmax.f32 %v337, 0.0
    %v434 = vmax.f32 %v340, 0.0
    %v435 = vmax.f32 %v345, 0.0
    %v436 = vmax.f32 %v348, 0.0
    %v437 = vmax.f32 %v353, 0.0
    %v438 = vmax.f32 %v356, 0.0
    %v439 = vmax.f32 %v361, 0.0
    %v440 = vmax.f32 %v364, 0.0
    %v441 = vmax.f32 %v369, 0.0
    %v442 = vmax.f32 %v372, 0.0
    %v443 = vmax.f32 %v377, 0.0
    %v444 = vmax.f32 %v380, 0.0
    %v445 = vmax.f32 %v385, 0.0
    %v446 = vmax.f32 %v388, 0.0
    %v447 = vmax.f32 %v393, 0.0
    %v448 = vmax.f32 %v396, 0.0
    %v449 = vmax.f32 %v401, 0.0
    %v450 = vmax.f32 %v404, 0.0
    %v451 = vmax.f32 %v409, 0.0
    %v452 = vmax.f32 %v412, 0.0
    %v453 = vmax.f32 %v417, 0.0
    %v454 = vmax.f32 %v420, 0.0
    %v455 = vpack.c.bf16 %v424, %v423
    %v456 = vpack.c.bf16 %v426, %v425
    %v457 = vpack.c.bf16 %v428, %v427
    %v458 = vpack.c.bf16 %v430, %v429
    %v459 = vpack.c.bf16 %v432, %v431
    %v460 = vpack.c.bf16 %v434, %v433
    %v461 = vpack.c.bf16 %v436, %v435
    %v462 = vpack.c.bf16 %v438, %v437
    %v463 = vpack.c.bf16 %v440, %v439
    %v464 = vpack.c.bf16 %v442, %v441
    %v465 = vpack.c.bf16 %v444, %v443
    %v466 = vpack.c.bf16 %v446, %v445
    %v467 = vpack.c.bf16 %v448, %v447
    %v468 = vpack.c.bf16 %v450, %v449
    %v469 = vpack.c.bf16 %v452, %v451
    %v470 = vpack.c.bf16 %v454, %v453
    %v471 = vld [vmem:[#allocation7] sm:$0xf]
    %v472 = vld [vmem:[#allocation7 + $0x4] sm:$0xf]
    %v473 = vld [vmem:[#allocation7 + $0x8] sm:$0xf]
    %v474 = vld [vmem:[#allocation7 + $0xc] sm:$0xf]
    %v475 = vld [vmem:[#allocation7 + $0x10] sm:$0xf]
    %v476 = vld [vmem:[#allocation7 + $0x14] sm:$0xf]
    %v477 = vld [vmem:[#allocation7 + $0x18] sm:$0xf]
    %v478 = vld [vmem:[#allocation7 + $0x1c] sm:$0xf]
    %v479 = vld [vmem:[#allocation7 + $0x20] sm:$0xf]
    %v480 = vld [vmem:[#allocation7 + $0x24] sm:$0xf]
    %v481 = vld [vmem:[#allocation7 + $0x28] sm:$0xf]
    %v482 = vld [vmem:[#allocation7 + $0x2c] sm:$0xf]
    %v483 = vld [vmem:[#allocation7 + $0x30] sm:$0xf]
    %v484 = vld [vmem:[#allocation7 + $0x34] sm:$0xf]
    %v485 = vld [vmem:[#allocation7 + $0x38] sm:$0xf]
    %v486 = vld [vmem:[#allocation7 + $0x3c] sm:$0xf]
    %v487 = vld [vmem:[%s4] sm:$0x1]
    %v489 = vlaneseq
    %v490 = vshrl.u32 %v489, 7
    %v491 = vsub.s32 0, %v490
    %v492 = vrot.slane %v487, %v491
    %v510 = vunpack.c.l.b16 %v471
    %v511 = vunpack.c.l.b16 %v472
    %v512 = vunpack.c.l.b16 %v473
    %v513 = vunpack.c.l.b16 %v474
    %v514 = vunpack.c.l.b16 %v475
    %v515 = vunpack.c.l.b16 %v476
    %v516 = vunpack.c.l.b16 %v477
    %v517 = vunpack.c.l.b16 %v478
    %v518 = vunpack.c.l.b16 %v479
    %v519 = vunpack.c.l.b16 %v480
    %v520 = vunpack.c.l.b16 %v481
    %v521 = vunpack.c.l.b16 %v482
    %v522 = vunpack.c.l.b16 %v483
    %v523 = vunpack.c.l.b16 %v484
    %v524 = vunpack.c.l.b16 %v485
    %v525 = vunpack.c.l.b16 %v486
    %v526 = vpack.c.b16 %v511, %v510
    %v527 = vpack.c.b16 %v513, %v512
    %v528 = vpack.c.b16 %v515, %v514
    %v529 = vpack.c.b16 %v517, %v516
    %v530 = vpack.c.b16 %v519, %v518
    %v531 = vpack.c.b16 %v521, %v520
    %v532 = vpack.c.b16 %v523, %v522
    %v533 = vpack.c.b16 %v525, %v524
    %542 = vmatprep.subr.bf16.mxu0 0
    %543 = vmatpush1.bf16.msra.mxu0 %v533
    %544 = vmatprep.subr.bf16.mxu0 0
    %545 = vmatpush1.bf16.msra.mxu0 %v532
    %546 = vmatprep.subr.bf16.mxu0 0
    %547 = vmatpush1.bf16.msra.mxu0 %v531
    %548 = vmatprep.subr.bf16.mxu0 0
    %549 = vmatpush1.bf16.msra.mxu0 %v530
    %550 = vmatprep.subr.bf16.mxu0 0
    %551 = vmatpush1.bf16.msra.mxu0 %v529
    %552 = vmatprep.subr.bf16.mxu0 0
    %553 = vmatpush1.bf16.msra.mxu0 %v528
    %554 = vmatprep.subr.bf16.mxu0 0
    %555 = vmatpush1.bf16.msra.mxu0 %v527
    %556 = vmatprep.subr.bf16.mxu0 0
    %557 = vmatpush1.bf16.msra.mxu0 %v526
    %558 = vmatprep.subr.bf16.mxu0 0
    %559 = vmatpush2.bf16.msra.mxu0 0
    %560 = vmatprep.subr.bf16.mxu0 0
    %561 = vmatpush2.bf16.msra.mxu0 0
    %562 = vmatprep.subr.bf16.mxu0 0
    %563 = vmatpush2.bf16.msra.mxu0 0
    %564 = vmatprep.subr.bf16.mxu0 0
    %565 = vmatpush2.bf16.msra.mxu0 0
    %566 = vmatprep.subr.bf16.mxu0 0
    %567 = vmatpush2.bf16.msra.mxu0 0
    %568 = vmatprep.subr.bf16.mxu0 0
    %569 = vmatpush2.bf16.msra.mxu0 0
    %570 = vmatprep.subr.bf16.mxu0 0
    %571 = vmatpush2.bf16.msra.mxu0 0
    %572 = vmatprep.subr.bf16.mxu0 0
    %573 = vmatpush2.bf16.msra.mxu0 0
    %574 = vmatprep.mubr.bf16.mxu0 0
    %575 = vmatmul.mubr.bf16.gmra.mxu0 %v455
    %v576 = vpop.f32.mrf.mxu0
    %v577 = vadd.f32 %v492, %v576
    %v578 = vpop.f32.mrf.mxu0
    %v579 = vpop.f32.mrf.mxu0
    %v580 = vadd.f32 %v492, %v579
    %v581 = vpop.f32.mrf.mxu0
    %582 = vmatprep.mubr.bf16.mxu0 0
    %583 = vmatmul.mubr.bf16.gmra.mxu0 %v456
    %v584 = vpop.f32.mrf.mxu0
    %v585 = vadd.f32 %v492, %v584
    %v586 = vpop.f32.mrf.mxu0
    %v587 = vpop.f32.mrf.mxu0
    %v588 = vadd.f32 %v492, %v587
    %v589 = vpop.f32.mrf.mxu0
    %590 = vmatprep.mubr.bf16.mxu0 0
    %591 = vmatmul.mubr.bf16.gmra.mxu0 %v457
    %v592 = vpop.f32.mrf.mxu0
    %v593 = vadd.f32 %v492, %v592
    %v594 = vpop.f32.mrf.mxu0
    %v595 = vpop.f32.mrf.mxu0
    %v596 = vadd.f32 %v492, %v595
    %v597 = vpop.f32.mrf.mxu0
    %598 = vmatprep.mubr.bf16.mxu0 0
    %599 = vmatmul.mubr.bf16.gmra.mxu0 %v458
    %v600 = vpop.f32.mrf.mxu0
    %v601 = vadd.f32 %v492, %v600
    %v602 = vpop.f32.mrf.mxu0
    %v603 = vpop.f32.mrf.mxu0
    %v604 = vadd.f32 %v492, %v603
    %v605 = vpop.f32.mrf.mxu0
    %606 = vmatprep.mubr.bf16.mxu0 0
    %607 = vmatmul.mubr.bf16.gmra.mxu0 %v459
    %v608 = vpop.f32.mrf.mxu0
    %v609 = vadd.f32 %v492, %v608
    %v610 = vpop.f32.mrf.mxu0
    %v611 = vpop.f32.mrf.mxu0
    %v612 = vadd.f32 %v492, %v611
    %v613 = vpop.f32.mrf.mxu0
    %614 = vmatprep.mubr.bf16.mxu0 0
    %615 = vmatmul.mubr.bf16.gmra.mxu0 %v460
    %v616 = vpop.f32.mrf.mxu0
    %v617 = vadd.f32 %v492, %v616
    %v618 = vpop.f32.mrf.mxu0
    %v619 = vpop.f32.mrf.mxu0
    %v620 = vadd.f32 %v492, %v619
    %v621 = vpop.f32.mrf.mxu0
    %622 = vmatprep.mubr.bf16.mxu0 0
    %623 = vmatmul.mubr.bf16.gmra.mxu0 %v461
    %v624 = vpop.f32.mrf.mxu0
    %v625 = vadd.f32 %v492, %v624
    %v626 = vpop.f32.mrf.mxu0
    %v627 = vpop.f32.mrf.mxu0
    %v628 = vadd.f32 %v492, %v627
    %v629 = vpop.f32.mrf.mxu0
    %630 = vmatprep.mubr.bf16.mxu0 0
    %631 = vmatmul.mubr.bf16.gmra.mxu0 %v462
    %v632 = vpop.f32.mrf.mxu0
    %v633 = vadd.f32 %v492, %v632
    %v634 = vpop.f32.mrf.mxu0
    %v635 = vpop.f32.mrf.mxu0
    %v636 = vadd.f32 %v492, %v635
    %v637 = vpop.f32.mrf.mxu0
    %638 = vmatprep.mubr.bf16.mxu0 0
    %639 = vmatmul.mubr.bf16.gmra.mxu0 %v463
    %v640 = vpop.f32.mrf.mxu0
    %v641 = vadd.f32 %v492, %v640
    %v642 = vpop.f32.mrf.mxu0
    %v643 = vpop.f32.mrf.mxu0
    %v644 = vadd.f32 %v492, %v643
    %v645 = vpop.f32.mrf.mxu0
    %646 = vmatprep.mubr.bf16.mxu0 0
    %647 = vmatmul.mubr.bf16.gmra.mxu0 %v464
    %v648 = vpop.f32.mrf.mxu0
    %v649 = vadd.f32 %v492, %v648
    %v650 = vpop.f32.mrf.mxu0
    %v651 = vpop.f32.mrf.mxu0
    %v652 = vadd.f32 %v492, %v651
    %v653 = vpop.f32.mrf.mxu0
    %654 = vmatprep.mubr.bf16.mxu0 0
    %655 = vmatmul.mubr.bf16.gmra.mxu0 %v465
    %v656 = vpop.f32.mrf.mxu0
    %v657 = vadd.f32 %v492, %v656
    %v658 = vpop.f32.mrf.mxu0
    %v659 = vpop.f32.mrf.mxu0
    %v660 = vadd.f32 %v492, %v659
    %v661 = vpop.f32.mrf.mxu0
    %662 = vmatprep.mubr.bf16.mxu0 0
    %663 = vmatmul.mubr.bf16.gmra.mxu0 %v466
    %v664 = vpop.f32.mrf.mxu0
    %v665 = vadd.f32 %v492, %v664
    %v666 = vpop.f32.mrf.mxu0
    %v667 = vpop.f32.mrf.mxu0
    %v668 = vadd.f32 %v492, %v667
    %v669 = vpop.f32.mrf.mxu0
    %670 = vmatprep.mubr.bf16.mxu0 0
    %671 = vmatmul.mubr.bf16.gmra.mxu0 %v467
    %v672 = vpop.f32.mrf.mxu0
    %v673 = vadd.f32 %v492, %v672
    %v674 = vpop.f32.mrf.mxu0
    %v675 = vpop.f32.mrf.mxu0
    %v676 = vadd.f32 %v492, %v675
    %v677 = vpop.f32.mrf.mxu0
    %678 = vmatprep.mubr.bf16.mxu0 0
    %679 = vmatmul.mubr.bf16.gmra.mxu0 %v468
    %v680 = vpop.f32.mrf.mxu0
    %v681 = vadd.f32 %v492, %v680
    %v682 = vpop.f32.mrf.mxu0
    %v683 = vpop.f32.mrf.mxu0
    %v684 = vadd.f32 %v492, %v683
    %v685 = vpop.f32.mrf.mxu0
    %686 = vmatprep.mubr.bf16.mxu0 0
    %687 = vmatmul.mubr.bf16.gmra.mxu0 %v469
    %v688 = vpop.f32.mrf.mxu0
    %v689 = vadd.f32 %v492, %v688
    %v690 = vpop.f32.mrf.mxu0
    %v691 = vpop.f32.mrf.mxu0
    %v692 = vadd.f32 %v492, %v691
    %v693 = vpop.f32.mrf.mxu0
    %694 = vmatprep.mubr.bf16.mxu0 0
    %695 = vmatmul.mubr.bf16.gmra.mxu0 %v470
    %v696 = vpop.f32.mrf.mxu0
    %v697 = vadd.f32 %v492, %v696
    %v698 = vpop.f32.mrf.mxu0
    %v699 = vpop.f32.mrf.mxu0
    %v700 = vadd.f32 %v492, %v699
    %v701 = vpop.f32.mrf.mxu0
    %702 = vdwg.mxu0
    %703 = vst [vmem:[#allocation8] sm:$0xff] %v577
    %704 = vst [vmem:[#allocation8 + $0x8] sm:$0xff] %v580
    %705 = vst [vmem:[#allocation8 + $0x10] sm:$0xff] %v585
    %706 = vst [vmem:[#allocation8 + $0x18] sm:$0xff] %v588
    %707 = vst [vmem:[#allocation8 + $0x20] sm:$0xff] %v593
    %708 = vst [vmem:[#allocation8 + $0x28] sm:$0xff] %v596
    %709 = vst [vmem:[#allocation8 + $0x30] sm:$0xff] %v601
    %710 = vst [vmem:[#allocation8 + $0x38] sm:$0xff] %v604
    %711 = vst [vmem:[#allocation8 + $0x40] sm:$0xff] %v609
    %712 = vst [vmem:[#allocation8 + $0x48] sm:$0xff] %v612
    %713 = vst [vmem:[#allocation8 + $0x50] sm:$0xff] %v617
    %714 = vst [vmem:[#allocation8 + $0x58] sm:$0xff] %v620
    %715 = vst [vmem:[#allocation8 + $0x60] sm:$0xff] %v625
    %716 = vst [vmem:[#allocation8 + $0x68] sm:$0xff] %v628
    %717 = vst [vmem:[#allocation8 + $0x70] sm:$0xff] %v633
    %718 = vst [vmem:[#allocation8 + $0x78] sm:$0xff] %v636
    %719 = vst [vmem:[#allocation8 + $0x80] sm:$0xff] %v641
    %720 = vst [vmem:[#allocation8 + $0x88] sm:$0xff] %v644
    %721 = vst [vmem:[#allocation8 + $0x90] sm:$0xff] %v649
    %722 = vst [vmem:[#allocation8 + $0x98] sm:$0xff] %v652
    %723 = vst [vmem:[#allocation8 + $0xa0] sm:$0xff] %v657
    %724 = vst [vmem:[#allocation8 + $0xa8] sm:$0xff] %v660
    %725 = vst [vmem:[#allocation8 + $0xb0] sm:$0xff] %v665
    %726 = vst [vmem:[#allocation8 + $0xb8] sm:$0xff] %v668
    %727 = vst [vmem:[#allocation8 + $0xc0] sm:$0xff] %v673
    %728 = vst [vmem:[#allocation8 + $0xc8] sm:$0xff] %v676
    %729 = vst [vmem:[#allocation8 + $0xd0] sm:$0xff] %v681
    %730 = vst [vmem:[#allocation8 + $0xd8] sm:$0xff] %v684
    %731 = vst [vmem:[#allocation8 + $0xe0] sm:$0xff] %v689
    %732 = vst [vmem:[#allocation8 + $0xe8] sm:$0xff] %v692
    %733 = vst [vmem:[#allocation8 + $0xf0] sm:$0xff] %v697
    %734 = vst [vmem:[#allocation8 + $0xf8] sm:$0xff] %v700
    // Predicated region
    $region34: #{tpu_custom_call.1} parent=1 // pred_check
      _
    $region35: #{tpu_custom_call.1} parent=1 // pred_check_branch
      %736 = sbr.rel (0) target = $region37
    $region36: #{tpu_custom_call.1} parent=1 // pred_region
      %s738 = ssub.s32 4096, 4096
      %739 = vsyncadd [#allocation4], %s738
      %s740 = sshll.u32 [#allocation8], 4
      %s741 = int_to_ptr.vmem [resolvable:$true] %s740
      %746 = dma.vmem_to_hbm [thread:$0]  %s741, 4096, %s5, [#allocation4], 128, 128, 8
    $region37: #{tpu_custom_call.1} parent=1 // pred_fallthru
      _
    // Predicated region
    $region38: #{tpu_custom_call.1} parent=1 // pred_check
      _
    $region39: #{tpu_custom_call.1} parent=1 // pred_check_branch
      %748 = sbr.rel (0) target = $region41
    $region40: #{tpu_custom_call.1} parent=1 // pred_region
      %749 = dma.done [#allocation4], 4096
    $region41: #{tpu_custom_call.1} parent=1 // pred_fallthru
      _
    %750 = vsyncpa [#allocation3], 1
    %751 = vsyncpa [#allocation6], 1
    %752 = vsyncpa [#allocation4], 1

</llo_original>
